<compile_context>
chip_gen: v5e
topology: v5e:2x2
jax: 0.10.0
libtpu: 0.0.40
codegen_flags: <defaults>
</compile_context>

<pallas_src>
import jax
import jax.numpy as jnp
from jax.experimental import pallas as pl
from jax.experimental.pallas import tpu as pltpu

IN_FEATURES = 2
OUT_FEATURES = 1
LANES = 128           # lane width of a vreg
SUBLANES = 8          # sublane count of an f32 vreg
MAX_TILE_ROWS = 2048  # rows of the (rows, 128) lane-dense layout per grid step
                      # -> 2 MiB in + 1 MiB out per step, ~6 MiB double-buffered


def _round_up(n, m):
    return ((n + m - 1) // m) * m


def linear_sigmoid_kernel(params_ref, x_ref, o_ref):
    # params_ref: SMEM (3,) = [w0, w1, b]          (scalar-prefetch arg)
    # x_ref:      VMEM (2, TB, 128)  x_ref[0]=feature-0 slab, x_ref[1]=feature-1 slab
    # o_ref:      VMEM (TB, 128)     lane-dense output slab
    w0 = params_ref[0]
    w1 = params_ref[1]
    b = params_ref[2]
    z = x_ref[0] * w0 + x_ref[1] * w1 + b            # pure VPU, no MXU
    o_ref[...] = jax.nn.sigmoid(z).astype(o_ref.dtype)  # exp/recip on the EUP


def neural_network_forward(x, weight, bias):
    """sigmoid(x @ weight.T + bias)

    x:      (B, 2) float32
    weight: (1, 2) float32   (PyTorch nn.Linear convention)
    bias:   (1,)   float32
    returns (B, 1) float32
    """
    B = x.shape[0]

    # ---- lane-dense packing (plain-JAX glue outside the kernel) ----
    rows_needed = max(SUBLANES, _round_up(pl.cdiv(B, LANES), SUBLANES))
    if rows_needed <= MAX_TILE_ROWS:
        num_tiles = 1
        tile_rows = rows_needed                      # multiple of 8, zero extra padding
    else:
        num_tiles = pl.cdiv(rows_needed, MAX_TILE_ROWS)
        # split as evenly as possible -> at most (num_tiles-1)*8 rows of padding
        tile_rows = _round_up(pl.cdiv(rows_needed, num_tiles), SUBLANES)
    rows = num_tiles * tile_rows
    b_pad = rows * LANES

    x_pad = jnp.pad(x.astype(jnp.float32), ((0, b_pad - B), (0, 0)))
    # Single merged slab: (2, rows, 128). One transpose instead of two
    # stride-2 column gathers; one input DMA stream into the kernel.
    x_feat = x_pad.T.reshape(IN_FEATURES, rows, LANES)
    # TODO(synk): a fully repack-free path (raw (B,2) in, in-kernel XLU lane
    # deinterleave via pltpu.roll) would remove the remaining wrapper transpose.

    # 3 scalars [w0, w1, b] prefetched into SMEM
    params = jnp.concatenate(
        [weight.reshape(-1), bias.reshape(-1)]).astype(jnp.float32)

    out_slab = pl.pallas_call(
        linear_sigmoid_kernel,
        out_shape=jax.ShapeDtypeStruct((rows, LANES), jnp.float32),
        grid_spec=pltpu.PrefetchScalarGridSpec(
            num_scalar_prefetch=1,   # params -> SMEM, passed first to the kernel
            grid=(num_tiles,),
            in_specs=[
                pl.BlockSpec((IN_FEATURES, tile_rows, LANES),
                             lambda i, p: (0, i, 0)),
            ],
            out_specs=pl.BlockSpec((tile_rows, LANES), lambda i, p: (i, 0)),
        ),
        compiler_params=pltpu.CompilerParams(
            # independent batch tiles: lets v7x split across its 2 TensorCores
            dimension_semantics=("parallel",),
        ),
    )(params, x_feat)

    # unpack lane-dense slab back to (B, 1)
    return out_slab.reshape(b_pad, 1)[:B]


if __name__ == "__main__":
    key = jax.random.PRNGKey(0)
    kx, kw, kb = jax.random.split(key, 3)

    # Small batch consistent with Linear(2, 1)
    B = 8
    x = jax.random.normal(kx, (B, IN_FEATURES), dtype=jnp.float32)

    # Parameter init mimicking PyTorch nn.Linear default:
    # uniform(-1/sqrt(in_features), 1/sqrt(in_features))
    bound = 1.0 / jnp.sqrt(jnp.float32(IN_FEATURES))
    weight = jax.random.uniform(kw, (OUT_FEATURES, IN_FEATURES),
                                minval=-bound, maxval=bound, dtype=jnp.float32)
    bias = jax.random.uniform(kb, (OUT_FEATURES,),
                              minval=-bound, maxval=bound, dtype=jnp.float32)

    out = neural_network_forward(x, weight, bias)
    out = jax.block_until_ready(out)

    # Reference check (plain JAX) to verify semantics
    ref = jax.nn.sigmoid(x @ weight.T + bias)
    assert out.shape == (B, OUT_FEATURES)
    assert jnp.allclose(out, ref, atol=1e-6, rtol=1e-6)

    print("KERNEL_OK")
</pallas_src>

<mosaic_0001>
module attributes {stable_mosaic.version = 11 : i64} {
  func.func @linear_sigmoid_kernel(%arg0: i32, %arg1: memref<3xf32, #tpu.memory_space<smem>>, %arg2: memref<2x8x128xf32, #tpu.memory_space<vmem>>, %arg3: memref<8x128xf32, #tpu.memory_space<vmem>>) attributes {dimension_semantics = [#tpu.dimension_semantics<parallel>], iteration_bounds = array<i64: 1>, scalar_prefetch = 1 : i64, scratch_operands = 0 : i64, tpu.core_type = #tpu.core_type<tc>, window_params = [{transform_indices = @transform_0, window_bounds = array<i64: 2, 8, 128>}, {transform_indices = @transform_1, window_bounds = array<i64: 8, 128>}]} {
    %c0 = arith.constant 0 : index
    %0 = memref.load %arg1[%c0] : memref<3xf32, #tpu.memory_space<smem>>
    %c1 = arith.constant 1 : index
    %1 = memref.load %arg1[%c1] : memref<3xf32, #tpu.memory_space<smem>>
    %c2 = arith.constant 2 : index
    %2 = memref.load %arg1[%c2] : memref<3xf32, #tpu.memory_space<smem>>
    %c0_0 = arith.constant 0 : index
    %c0_1 = arith.constant 0 : index
    %c0_2 = arith.constant 0 : index
    %3 = vector.load %arg2[%c0_0, %c0_1, %c0_2] : memref<2x8x128xf32, #tpu.memory_space<vmem>>, vector<1x8x128xf32>
    %4 = vector.shape_cast %3 : vector<1x8x128xf32> to vector<8x128xf32>
    %5 = vector.broadcast %0 : f32 to vector<8x128xf32>
    %6 = arith.mulf %4, %5 : vector<8x128xf32>
    %c1_3 = arith.constant 1 : index
    %c0_4 = arith.constant 0 : index
    %c0_5 = arith.constant 0 : index
    %7 = vector.load %arg2[%c1_3, %c0_4, %c0_5] : memref<2x8x128xf32, #tpu.memory_space<vmem>>, vector<1x8x128xf32>
    %8 = vector.shape_cast %7 : vector<1x8x128xf32> to vector<8x128xf32>
    %9 = vector.broadcast %1 : f32 to vector<8x128xf32>
    %10 = arith.mulf %8, %9 : vector<8x128xf32>
    %11 = arith.addf %6, %10 : vector<8x128xf32>
    %12 = vector.broadcast %2 : f32 to vector<8x128xf32>
    %13 = arith.addf %11, %12 : vector<8x128xf32>
    %14 = arith.negf %13 : vector<8x128xf32>
    %15 = math.exp %14 : vector<8x128xf32>
    %cst = arith.constant 1.000000e+00 : f32
    %16 = vector.broadcast %cst : f32 to vector<8x128xf32>
    %17 = arith.addf %16, %15 : vector<8x128xf32>
    %18 = arith.divf %16, %17 : vector<8x128xf32>
    %c0_6 = arith.constant 0 : index
    %c0_7 = arith.constant 0 : index
    %19 = vector.load %arg3[%c0_6, %c0_7] : memref<8x128xf32, #tpu.memory_space<vmem>>, vector<8x128xf32>
    tpu.vector_store %arg3[%c0_6, %c0_7], %18 {strides = array<i32>} : memref<8x128xf32, #tpu.memory_space<vmem>>, vector<8x128xf32>,
    return
  }
  func.func @transform_0(%arg0: i32, %arg1: memref<3xf32, #tpu.memory_space<smem>>) -> (i32, i32, i32) {
    %c0_i32 = arith.constant 0 : i32
    %c0_i32_0 = arith.constant 0 : i32
    %c0_i32_1 = arith.constant 0 : i32
    return %c0_i32, %arg0, %c0_i32_0 : i32, i32, i32
  }
  func.func @transform_1(%arg0: i32, %arg1: memref<3xf32, #tpu.memory_space<smem>>) -> (i32, i32) {
    %c0_i32 = arith.constant 0 : i32
    %c0_i32_0 = arith.constant 0 : i32
    return %arg0, %c0_i32 : i32, i32
  }
}

</mosaic_0001>

<llo_original>
// kernel: tpu_custom_call.1
$region0: #{tpu_custom_call.1}
  #allocation0 [shape = 'u32[]', space=smem, size = 0x4, offset = 0x4, fixed_abs, tag = 'smem constant byte address 0x4 - core index']
  #allocation1 [shape = 'u32[72,128]{1,0:T(1,128)}', space=vmem, size = 0x9000, scoped, tag = 'internal scratch']
  #allocation2 [shape = 's32[1]{0}', space=sflag, size = 0x4, scoped, tag = 'scoped memory for tpu_custom_call.1']
  #allocation3 [shape = 'u8[512]{0}', space=smem, size = 0x200, scoped, tag = 'prefetched SMEM operand 0']
  %s0 = inlined_call_operand.hbm [shape: f32[3], index: 0, kind: input, shape index: {}]
  %s1 = inlined_call_operand.hbm [shape: f32[2,8,128], index: 1, kind: input, shape index: {}]
  %s2 = inlined_call_operand.hbm [shape: f32[8,128], index: 2, kind: output, shape index: {}]
  %s3 = sld [smem:[#allocation0]]
  $region18: #{tpu_custom_call.1} parent=0
    _
  %s5 = ssub.s32 1, %s3
  %s6 = scalar_select 0, %s5, %s3
  %s8 = sshll.u32 %s0, 4
  %s9 = int_to_ptr.hbm [resolvable:$true] %s8
  %11 = dma.hbm_to_smem %s9, 16, [#allocation3], [#allocation2]
  %13 = dma.done [#allocation2], 16
  %14 = sfence
  $region1: #{tpu_custom_call.1} parent=0
    #allocation4 [shape = 'u8[8192]{0}', space=vmem, size = 0x2000, scoped, tag = 'input window, operand 1, single buffered']
    #allocation5 [shape = 's32[1]{0}', space=sflag, size = 0x4, scoped, tag = 'scoped memory for tpu_custom_call.1']
    #allocation6 [shape = 's32[1]{0}', space=sflag, size = 0x4, scoped, tag = 'scoped memory for tpu_custom_call.1']
    #allocation7 [shape = 'u8[4096]{0}', space=vmem, size = 0x1000, scoped, tag = 'output window, operand 0, single buffered']
    %15 = vsyncpa [#allocation5], 0
    %16 = vsyncpa [#allocation6], 0
    // Predicated region
    $region2: #{tpu_custom_call.1} parent=1 // pred_check
      _
    $region3: #{tpu_custom_call.1} parent=1 // pred_check_branch
      %18 = sbr.rel (0) target = $region5
    $region4: #{tpu_custom_call.1} parent=1 // pred_region
      %20 = vsyncadd [#allocation5], 0
      %s21 = sshll.u32 %s1, 4
      %s22 = int_to_ptr.hbm [resolvable:$true] %s21
      %s23 = sshll.u32 [#allocation4], 4
      %s24 = int_to_ptr.vmem [resolvable:$true] %s23
      %29 = dma.hbm_to_vmem [thread:$0]  %s22, 256, %s24, [#allocation5], 128, 128, 8
    $region5: #{tpu_custom_call.1} parent=1 // pred_fallthru
      _
    // Predicated region
    $region6: #{tpu_custom_call.1} parent=1 // pred_check
      _
    $region7: #{tpu_custom_call.1} parent=1 // pred_check_branch
      %31 = sbr.rel (0) target = $region9
    $region8: #{tpu_custom_call.1} parent=1 // pred_region
      %33 = dma.done [#allocation5], 256
    $region9: #{tpu_custom_call.1} parent=1 // pred_fallthru
      _
    %s34 = sld [smem:[#allocation3]]
    %s35 = sld [smem:[#allocation3 + $0x1]]
    %s36 = sld [smem:[#allocation3 + $0x2]]
    %v37 = vld [vmem:[#allocation4] sm:$0xff]
    %v38 = vstv %s34
    %v39 = vmul.f32 %v37, %v38
    %s40 = scalar_lea.vmem [#allocation4], 8
    %v41 = vld [vmem:[%s40] sm:$0xff]
    %v42 = vstv %s35
    %v43 = vmul.f32 %v41, %v42
    %v44 = vadd.f32 %v39, %v43
    %v45 = vstv %s36
    %v46 = vadd.f32 %v44, %v45
    %v47 = vxor.u32 %v46, 2147483648
    %v48 = vmul.f32 %v47, 1.442695
    %v49 = vpow.pop %v48
    %v50 = vadd.f32 %v49, 1.0
    %v51 = vrcp.pop %v50
    %v52 = vmul.f32 %v50, %v51
    %v53 = vsub.f32 1.0, %v52
    %v54 = vmul.f32 %v51, %v53
    %v55 = vadd.f32 %v51, %v54
    %vm56 = vweird.f32 %v50
    %vm57 = vweird.f32 %v51
    %vm58 = vmor %vm56, %vm57
    %v59 = vsel %vm58, %v51, %v55
    %v60 = vand.u32 2147483647, %v50
    %vm61 = vcmp.eq.f32.partialorder %v60, 8.507059e+37
    %v62 = vand.u32 %v50, 2147483648
    %v63 = vor.u32 1.1754944e-38, %v62
    %v64 = vsel %vm61, %v63, %v59
    %v65 = vmul.f32 1.0, %v64
    %66 = vst [vmem:[#allocation7] sm:$0xff] %v65
    // Predicated region
    $region10: #{tpu_custom_call.1} parent=1 // pred_check
      _
    $region11: #{tpu_custom_call.1} parent=1 // pred_check_branch
      %68 = sbr.rel (0) target = $region13
    $region12: #{tpu_custom_call.1} parent=1 // pred_region
      %70 = vsyncadd [#allocation6], 0
      %s72 = sshll.u32 [#allocation7], 4
      %s73 = int_to_ptr.vmem [resolvable:$true] %s72
      %s74 = sshll.u32 %s2, 4
      %s75 = int_to_ptr.hbm [resolvable:$true] %s74
      %77 = dma.vmem_to_hbm [thread:$0]  %s73, 128, %s75, [#allocation6]
    $region13: #{tpu_custom_call.1} parent=1 // pred_fallthru
      _
    // Predicated region
    $region14: #{tpu_custom_call.1} parent=1 // pred_check
      _
    $region15: #{tpu_custom_call.1} parent=1 // pred_check_branch
      %79 = sbr.rel (0) target = $region17
    $region16: #{tpu_custom_call.1} parent=1 // pred_region
      %81 = dma.done [#allocation6], 128
    $region17: #{tpu_custom_call.1} parent=1 // pred_fallthru
      _
    %82 = vsyncpa [#allocation5], 1
    %83 = vsyncpa [#allocation6], 1

</llo_original>
